<compile_context>
chip_gen: v6e
topology: v6e:2x2x1
jax: 0.10.0
libtpu: 0.0.40
codegen_flags: <defaults>
</compile_context>

<pallas_src>
import functools

import jax
import jax.numpy as jnp
from jax.experimental import pallas as pl
from jax.experimental.pallas import tpu as pltpu

_LANE = 128
_SUBLANE = 8
_IN_PAD = 8      # input_dim 5 -> 8 (sublane multiple) for a clean MXU K dim


def _round_up(v, m):
    return ((v + m - 1) // m) * m


def _mlp_kernel(x_ref, w1_ref, b1_ref, w2_ref, b2_ref, w3_ref, b3_ref, o_ref,
                *, out_dim):
    # ---- Layer 1: (tm, 8) @ (8, 128) f32 matmul. K is tiny; MXU has huge
    # slack in this HBM-writeback-bound kernel, so keep it f32 for accuracy.
    h1 = jnp.dot(x_ref[...], w1_ref[...], preferred_element_type=jnp.float32)
    h1 = jnp.maximum(h1 + b1_ref[...], 0.0)

    # ---- Layer 2: bf16 operands, f32 accumulation (native MXU dtype).
    h2 = jnp.dot(h1.astype(jnp.bfloat16), w2_ref[...],
                 preferred_element_type=jnp.float32)
    h2 = jnp.maximum(h2 + b2_ref[...], 0.0)

    # ---- Layer 3: (tm, 128) @ (128, 384) -> (tm, 384); only the first
    # out_dim (=280) columns are stored, so HBM writeback is un-padded.
    out = jnp.dot(h2.astype(jnp.bfloat16), w3_ref[...],
                  preferred_element_type=jnp.float32) + b3_ref[...]
    o_ref[...] = out[:, :out_dim].astype(o_ref.dtype)


def prepare_params(params):
    """One-time pad + cast of weights (call once, outside the hot path).

    Pads input dim 5->8, hidden 64->128, output 280->384 with zeros; casts the
    two big MXU weight matrices to bf16 (biases/accumulation stay f32).
    """
    w1, b1 = params["w1"], params["b1"]
    w2, b2 = params["w2"], params["b2"]
    w3, b3 = params["w3"], params["b3"]
    in_dim, hid = w1.shape
    out_dim = w3.shape[1]
    hid_pad = _round_up(hid, _LANE)
    out_pad = _round_up(out_dim, _LANE)
    di, dh, do = _IN_PAD - in_dim, hid_pad - hid, out_pad - out_dim
    return {
        "w1": jnp.pad(w1, ((0, di), (0, dh))).astype(jnp.float32),
        "b1": jnp.pad(b1.reshape(1, -1), ((0, 0), (0, dh))).astype(jnp.float32),
        "w2": jnp.pad(w2, ((0, dh), (0, dh))).astype(jnp.bfloat16),
        "b2": jnp.pad(b2.reshape(1, -1), ((0, 0), (0, dh))).astype(jnp.float32),
        "w3": jnp.pad(w3, ((0, dh), (0, do))).astype(jnp.bfloat16),
        "b3": jnp.pad(b3.reshape(1, -1), ((0, 0), (0, do))).astype(jnp.float32),
    }


@functools.partial(jax.jit,
                   static_argnames=("out_dim", "block_batch", "out_dtype"))
def surrogate_ca_forward(x, padded_params, out_dim=280, block_batch=1024,
                         out_dtype=jnp.float32):
    """x: (batch, input_dim) f32. padded_params: output of prepare_params."""
    batch, in_dim = x.shape
    w1p, b1p = padded_params["w1"], padded_params["b1"]
    w2p, b2p = padded_params["w2"], padded_params["b2"]
    w3p, b3p = padded_params["w3"], padded_params["b3"]
    in_pad = w1p.shape[0]
    hid_pad = w1p.shape[1]
    out_pad = w3p.shape[1]

    # Batch tiling: tile rows are a multiple of 8, capped at block_batch, and
    # we aim for >=2 grid steps so the "parallel" axis splits across v7x's
    # two TensorCores.
    b0 = _round_up(max(batch, _SUBLANE), _SUBLANE)
    half = _round_up(pl.cdiv(b0, 2), _SUBLANE)
    tm = max(_SUBLANE, min(block_batch, half))
    b_pad = _round_up(batch, tm)
    grid = (b_pad // tm,)

    xp = jnp.pad(x.astype(jnp.float32),
                 ((0, b_pad - batch), (0, in_pad - in_dim)))

    # Weights/biases: constant block index -> fetched once, VMEM-resident
    # across all batch tiles.
    def const_spec(a):
        return pl.BlockSpec(a.shape, lambda i: (0, 0))

    out_itemsize = jnp.dtype(out_dtype).itemsize
    flops = 2 * b_pad * (in_pad * hid_pad + hid_pad * hid_pad
                         + hid_pad * out_pad)
    bytes_accessed = (
        xp.size * xp.dtype.itemsize
        + sum(a.size * a.dtype.itemsize
              for a in (w1p, b1p, w2p, b2p, w3p, b3p))
        + b_pad * out_dim * out_itemsize
    )

    kernel = functools.partial(_mlp_kernel, out_dim=out_dim)
    out = pl.pallas_call(
        kernel,
        out_shape=jax.ShapeDtypeStruct((b_pad, out_dim), out_dtype),
        grid=grid,
        in_specs=[
            pl.BlockSpec((tm, in_pad), lambda i: (i, 0)),
            const_spec(w1p), const_spec(b1p),
            const_spec(w2p), const_spec(b2p),
            const_spec(w3p), const_spec(b3p),
        ],
        out_specs=pl.BlockSpec((tm, out_dim), lambda i: (i, 0)),
        compiler_params=pltpu.CompilerParams(
            dimension_semantics=("parallel",),
        ),
        cost_estimate=pl.CostEstimate(
            flops=flops, transcendentals=0, bytes_accessed=bytes_accessed),
    )(xp, w1p, b1p, w2p, b2p, w3p, b3p)

    return out[:batch]


def init_params(key, input_dim=5, hidden_dim=64, output_dim=280):
    """Deterministic init mimicking nn.Linear default (U[-1/sqrt(fan_in), ...])."""
    ks = jax.random.split(key, 6)

    def lin(kw, kb, fan_in, fan_out):
        bound = 1.0 / jnp.sqrt(fan_in)
        w = jax.random.uniform(kw, (fan_in, fan_out), jnp.float32, -bound, bound)
        b = jax.random.uniform(kb, (1, fan_out), jnp.float32, -bound, bound)
        return w, b

    w1, b1 = lin(ks[0], ks[1], input_dim, hidden_dim)
    w2, b2 = lin(ks[2], ks[3], hidden_dim, hidden_dim)
    w3, b3 = lin(ks[4], ks[5], hidden_dim, output_dim)
    return {"w1": w1, "b1": b1, "w2": w2, "b2": b2, "w3": w3, "b3": b3}


def _reference_forward(x, p):
    h1 = jnp.maximum(x @ p["w1"] + p["b1"], 0.0)
    h2 = jnp.maximum(h1 @ p["w2"] + p["b2"], 0.0)
    return h2 @ p["w3"] + p["b3"]


if __name__ == "__main__":
    key = jax.random.PRNGKey(0)
    k_params, k_x1, k_x2 = jax.random.split(key, 3)

    input_dim, hidden_dim, output_dim = 5, 64, 280
    params = init_params(k_params, input_dim, hidden_dim, output_dim)
    padded = prepare_params(params)   # one-time pad/cast, outside the hot path

    # Single-tile case (batch=8, grid=(1,)).
    x1 = jax.random.normal(k_x1, (8, input_dim), jnp.float32)
    out1 = jax.block_until_ready(
        surrogate_ca_forward(x1, padded, out_dim=output_dim))
    ref1 = _reference_forward(x1, params)
    assert out1.shape == (8, output_dim), out1.shape
    # bf16 MXU operands -> loosened tolerance vs. the f32 reference.
    assert jnp.allclose(out1, ref1, atol=3e-2, rtol=3e-2), "mismatch (batch=8)"

    # Multi-tile case: batch not divisible by the tile and > tile
    # (exercises batch padding, the row slice, and the multi-step grid).
    x2 = jax.random.normal(k_x2, (37, input_dim), jnp.float32)
    out2 = jax.block_until_ready(
        surrogate_ca_forward(x2, padded, out_dim=output_dim, block_batch=16))
    ref2 = _reference_forward(x2, params)
    assert out2.shape == (37, output_dim), out2.shape
    assert jnp.allclose(out2, ref2, atol=3e-2, rtol=3e-2), "mismatch (batch=37)"

    print("KERNEL_OK")
</pallas_src>

<mosaic_0001>
module attributes {stable_mosaic.version = 11 : i64} {
  func.func @_mlp_kernel(%arg0: i32, %arg1: memref<8x8xf32, #tpu.memory_space<vmem>>, %arg2: memref<8x128xf32, #tpu.memory_space<vmem>>, %arg3: memref<1x128xf32, #tpu.memory_space<vmem>>, %arg4: memref<128x128xbf16, #tpu.memory_space<vmem>>, %arg5: memref<1x128xf32, #tpu.memory_space<vmem>>, %arg6: memref<128x384xbf16, #tpu.memory_space<vmem>>, %arg7: memref<1x384xf32, #tpu.memory_space<vmem>>, %arg8: memref<8x280xf32, #tpu.memory_space<vmem>>) attributes {dimension_semantics = [#tpu.dimension_semantics<parallel>], iteration_bounds = array<i64: 1>, scalar_prefetch = 0 : i64, scratch_operands = 0 : i64, tpu.core_type = #tpu.core_type<tc>, window_params = [{transform_indices = @transform_0, window_bounds = array<i64: 8, 8>}, {pipeline_mode = #tpu.pipeline_mode<synchronous>, transform_indices = @transform_1, window_bounds = array<i64: 8, 128>}, {pipeline_mode = #tpu.pipeline_mode<synchronous>, transform_indices = @transform_2, window_bounds = array<i64: 1, 128>}, {pipeline_mode = #tpu.pipeline_mode<synchronous>, transform_indices = @transform_3, window_bounds = array<i64: 128, 128>}, {pipeline_mode = #tpu.pipeline_mode<synchronous>, transform_indices = @transform_4, window_bounds = array<i64: 1, 128>}, {pipeline_mode = #tpu.pipeline_mode<synchronous>, transform_indices = @transform_5, window_bounds = array<i64: 128, 384>}, {pipeline_mode = #tpu.pipeline_mode<synchronous>, transform_indices = @transform_6, window_bounds = array<i64: 1, 384>}, {transform_indices = @transform_7, window_bounds = array<i64: 8, 280>}]} {
    %c0 = arith.constant 0 : index
    %c0_0 = arith.constant 0 : index
    %0 = vector.load %arg1[%c0, %c0_0] : memref<8x8xf32, #tpu.memory_space<vmem>>, vector<8x8xf32>
    %c0_1 = arith.constant 0 : index
    %c0_2 = arith.constant 0 : index
    %1 = vector.load %arg2[%c0_1, %c0_2] : memref<8x128xf32, #tpu.memory_space<vmem>>, vector<8x128xf32>
    %cst = arith.constant dense<0.000000e+00> : vector<8x128xf32>
    %2 = tpu.matmul %0, %1, %cst {dimension_numbers = #tpu.dot_dimension_numbers<[1], [0], [0], [1], [0, 0, 1, 1], [], []>} : vector<8x8xf32>, vector<8x128xf32>, vector<8x128xf32> -> vector<8x128xf32>
    %c0_3 = arith.constant 0 : index
    %c0_4 = arith.constant 0 : index
    %3 = vector.load %arg3[%c0_3, %c0_4] : memref<1x128xf32, #tpu.memory_space<vmem>>, vector<1x128xf32>
    %4 = vector.broadcast %3 : vector<1x128xf32> to vector<8x128xf32>
    %5 = arith.addf %2, %4 : vector<8x128xf32>
    %cst_5 = arith.constant 0.000000e+00 : f32
    %6 = vector.broadcast %cst_5 : f32 to vector<8x128xf32>
    %7 = arith.maximumf %5, %6 : vector<8x128xf32>
    %8 = arith.truncf %7 : vector<8x128xf32> to vector<8x128xbf16>
    %c0_6 = arith.constant 0 : index
    %c0_7 = arith.constant 0 : index
    %9 = vector.load %arg4[%c0_6, %c0_7] : memref<128x128xbf16, #tpu.memory_space<vmem>>, vector<128x128xbf16>
    %cst_8 = arith.constant dense<0.000000e+00> : vector<8x128xf32>
    %10 = tpu.matmul %8, %9, %cst_8 {dimension_numbers = #tpu.dot_dimension_numbers<[1], [0], [0], [1], [0, 0, 1, 1], [], []>} : vector<8x128xbf16>, vector<128x128xbf16>, vector<8x128xf32> -> vector<8x128xf32>
    %c0_9 = arith.constant 0 : index
    %c0_10 = arith.constant 0 : index
    %11 = vector.load %arg5[%c0_9, %c0_10] : memref<1x128xf32, #tpu.memory_space<vmem>>, vector<1x128xf32>
    %12 = vector.broadcast %11 : vector<1x128xf32> to vector<8x128xf32>
    %13 = arith.addf %10, %12 : vector<8x128xf32>
    %cst_11 = arith.constant 0.000000e+00 : f32
    %14 = vector.broadcast %cst_11 : f32 to vector<8x128xf32>
    %15 = arith.maximumf %13, %14 : vector<8x128xf32>
    %16 = arith.truncf %15 : vector<8x128xf32> to vector<8x128xbf16>
    %c0_12 = arith.constant 0 : index
    %c0_13 = arith.constant 0 : index
    %17 = vector.load %arg6[%c0_12, %c0_13] : memref<128x384xbf16, #tpu.memory_space<vmem>>, vector<128x384xbf16>
    %cst_14 = arith.constant dense<0.000000e+00> : vector<8x384xf32>
    %18 = tpu.matmul %16, %17, %cst_14 {dimension_numbers = #tpu.dot_dimension_numbers<[1], [0], [0], [1], [0, 0, 1, 1], [], []>} : vector<8x128xbf16>, vector<128x384xbf16>, vector<8x384xf32> -> vector<8x384xf32>
    %c0_15 = arith.constant 0 : index
    %c0_16 = arith.constant 0 : index
    %19 = vector.load %arg7[%c0_15, %c0_16] : memref<1x384xf32, #tpu.memory_space<vmem>>, vector<1x384xf32>
    %20 = vector.broadcast %19 : vector<1x384xf32> to vector<8x384xf32>
    %21 = arith.addf %18, %20 : vector<8x384xf32>
    %22 = vector.extract_strided_slice %21 {offsets = [0, 0], sizes = [8, 280], strides = [1, 1]} : vector<8x384xf32> to vector<8x280xf32>
    %c0_17 = arith.constant 0 : index
    %c0_18 = arith.constant 0 : index
    %23 = vector.load %arg8[%c0_17, %c0_18] : memref<8x280xf32, #tpu.memory_space<vmem>>, vector<8x280xf32>
    tpu.vector_store %arg8[%c0_17, %c0_18], %22 {strides = array<i32>} : memref<8x280xf32, #tpu.memory_space<vmem>>, vector<8x280xf32>,
    return
  }
  func.func @transform_0(%arg0: i32) -> (i32, i32) {
    %c0_i32 = arith.constant 0 : i32
    %c0_i32_0 = arith.constant 0 : i32
    return %arg0, %c0_i32 : i32, i32
  }
  func.func @transform_1(%arg0: i32) -> (i32, i32) {
    %c0_i32 = arith.constant 0 : i32
    %c0_i32_0 = arith.constant 0 : i32
    %c0_i32_1 = arith.constant 0 : i32
    return %c0_i32, %c0_i32_0 : i32, i32
  }
  func.func @transform_2(%arg0: i32) -> (i32, i32) {
    %c0_i32 = arith.constant 0 : i32
    %c0_i32_0 = arith.constant 0 : i32
    %c0_i32_1 = arith.constant 0 : i32
    return %c0_i32, %c0_i32_0 : i32, i32
  }
  func.func @transform_3(%arg0: i32) -> (i32, i32) {
    %c0_i32 = arith.constant 0 : i32
    %c0_i32_0 = arith.constant 0 : i32
    %c0_i32_1 = arith.constant 0 : i32
    return %c0_i32, %c0_i32_0 : i32, i32
  }
  func.func @transform_4(%arg0: i32) -> (i32, i32) {
    %c0_i32 = arith.constant 0 : i32
    %c0_i32_0 = arith.constant 0 : i32
    %c0_i32_1 = arith.constant 0 : i32
    return %c0_i32, %c0_i32_0 : i32, i32
  }
  func.func @transform_5(%arg0: i32) -> (i32, i32) {
    %c0_i32 = arith.constant 0 : i32
    %c0_i32_0 = arith.constant 0 : i32
    %c0_i32_1 = arith.constant 0 : i32
    return %c0_i32, %c0_i32_0 : i32, i32
  }
  func.func @transform_6(%arg0: i32) -> (i32, i32) {
    %c0_i32 = arith.constant 0 : i32
    %c0_i32_0 = arith.constant 0 : i32
    %c0_i32_1 = arith.constant 0 : i32
    return %c0_i32, %c0_i32_0 : i32, i32
  }
  func.func @transform_7(%arg0: i32) -> (i32, i32) {
    %c0_i32 = arith.constant 0 : i32
    %c0_i32_0 = arith.constant 0 : i32
    return %arg0, %c0_i32 : i32, i32
  }
}

</mosaic_0001>

<llo_original>
// kernel: surrogate_ca_forward.1
$region0: #{surrogate_ca_forward.1}
  #allocation0 [shape = 'u32[]', space=smem, size = 0x4, offset = 0x4, fixed_abs, tag = 'smem constant byte address 0x4 - core index']
  #allocation1 [shape = 'u32[144,128]{1,0:T(1,128)}', space=vmem, size = 0x12000, scoped, tag = 'internal scratch']
  %s0 = inlined_call_operand.vmem [shape: f32[8,8], index: 0, kind: input, shape index: {}]
  %s1 = inlined_call_operand.vmem [shape: f32[8,128], index: 1, kind: input, shape index: {}]
  %s2 = inlined_call_operand.vmem [shape: f32[1,128], index: 2, kind: input, shape index: {}]
  %s3 = inlined_call_operand.hbm [shape: bf16[128,128], index: 3, kind: input, shape index: {}]
  %s4 = inlined_call_operand.vmem [shape: f32[1,128], index: 4, kind: input, shape index: {}]
  %s5 = inlined_call_operand.hbm [shape: bf16[128,384], index: 5, kind: input, shape index: {}]
  %s6 = inlined_call_operand.vmem [shape: f32[1,384], index: 6, kind: input, shape index: {}]
  %s7 = inlined_call_operand.hbm [shape: f32[8,280], index: 7, kind: output, shape index: {}]
  %s8 = sld [smem:[#allocation0]]
  $region46: #{surrogate_ca_forward.1} parent=0
    _
  %s10 = ssub.s32 1, %s8
  %s11 = scalar_select 0, %s10, %s8
  $region1: #{surrogate_ca_forward.1} parent=0
    #allocation2 [shape = 'u8[32768]{0}', space=vmem, size = 0x8000, scoped, tag = 'input window, operand 3, single buffered']
    #allocation3 [shape = 's32[1]{0}', space=sflag, size = 0x4, scoped, tag = 'scoped memory for surrogate_ca_forward.1']
    #allocation4 [shape = 's32[1]{0}', space=sflag, size = 0x4, scoped, tag = 'scoped memory for surrogate_ca_forward.1']
    #allocation5 [shape = 'u8[98304]{0}', space=vmem, size = 0x18000, scoped, tag = 'input window, operand 5, single buffered']
    #allocation6 [shape = 's32[1]{0}', space=sflag, size = 0x4, scoped, tag = 'scoped memory for surrogate_ca_forward.1']
    #allocation7 [shape = 'u8[12288]{0}', space=vmem, size = 0x3000, scoped, tag = 'output window, operand 0, single buffered']
    %12 = vsyncpa [#allocation3], 0
    %13 = vsyncpa [#allocation6], 0
    %14 = vsyncpa [#allocation4], 0
    // Predicated region
    $region2: #{surrogate_ca_forward.1} parent=1 // pred_check
      _
    $region3: #{surrogate_ca_forward.1} parent=1 // pred_check_branch
      %16 = sbr.rel (0) target = $region5
    $region4: #{surrogate_ca_forward.1} parent=1 // pred_region
      _
    $region5: #{surrogate_ca_forward.1} parent=1 // pred_fallthru
      _
    // Predicated region
    $region6: #{surrogate_ca_forward.1} parent=1 // pred_check
      _
    $region7: #{surrogate_ca_forward.1} parent=1 // pred_check_branch
      %18 = sbr.rel (0) target = $region9
    $region8: #{surrogate_ca_forward.1} parent=1 // pred_region
      _
    $region9: #{surrogate_ca_forward.1} parent=1 // pred_fallthru
      _
    // Predicated region
    $region10: #{surrogate_ca_forward.1} parent=1 // pred_check
      _
    $region11: #{surrogate_ca_forward.1} parent=1 // pred_check_branch
      %20 = sbr.rel (0) target = $region13
    $region12: #{surrogate_ca_forward.1} parent=1 // pred_region
      _
    $region13: #{surrogate_ca_forward.1} parent=1 // pred_fallthru
      _
    // Predicated region
    $region14: #{surrogate_ca_forward.1} parent=1 // pred_check
      _
    $region15: #{surrogate_ca_forward.1} parent=1 // pred_check_branch
      %22 = sbr.rel (0) target = $region17
    $region16: #{surrogate_ca_forward.1} parent=1 // pred_region
      %s24 = ssub.s32 1024, 1024
      %25 = vsyncadd [#allocation3], %s24
      %s26 = sshll.u32 [#allocation2], 4
      %s27 = int_to_ptr.vmem [resolvable:$true] %s26
      %32 = dma.hbm_to_vmem [thread:$0]  %s3, 1024, %s27, [#allocation3], 64, 64, 4
    $region17: #{surrogate_ca_forward.1} parent=1 // pred_fallthru
      _
    // Predicated region
    $region18: #{surrogate_ca_forward.1} parent=1 // pred_check
      _
    $region19: #{surrogate_ca_forward.1} parent=1 // pred_check_branch
      %34 = sbr.rel (0) target = $region21
    $region20: #{surrogate_ca_forward.1} parent=1 // pred_region
      _
    $region21: #{surrogate_ca_forward.1} parent=1 // pred_fallthru
      _
    // Predicated region
    $region22: #{surrogate_ca_forward.1} parent=1 // pred_check
      _
    $region23: #{surrogate_ca_forward.1} parent=1 // pred_check_branch
      %36 = sbr.rel (0) target = $region25
    $region24: #{surrogate_ca_forward.1} parent=1 // pred_region
      %s38 = ssub.s32 3072, 3072
      %39 = vsyncadd [#allocation6], %s38
      %s40 = sshll.u32 [#allocation5], 4
      %s41 = int_to_ptr.vmem [resolvable:$true] %s40
      %46 = dma.hbm_to_vmem [thread:$0]  %s5, 3072, %s41, [#allocation6], 192, 192, 12
    $region25: #{surrogate_ca_forward.1} parent=1 // pred_fallthru
      _
    // Predicated region
    $region26: #{surrogate_ca_forward.1} parent=1 // pred_check
      _
    $region27: #{surrogate_ca_forward.1} parent=1 // pred_check_branch
      %48 = sbr.rel (0) target = $region29
    $region28: #{surrogate_ca_forward.1} parent=1 // pred_region
      _
    $region29: #{surrogate_ca_forward.1} parent=1 // pred_fallthru
      _
    // Predicated region
    $region30: #{surrogate_ca_forward.1} parent=1 // pred_check
      _
    $region31: #{surrogate_ca_forward.1} parent=1 // pred_check_branch
      %50 = sbr.rel (0) target = $region33
    $region32: #{surrogate_ca_forward.1} parent=1 // pred_region
      %51 = dma.done [#allocation3], 1024
    $region33: #{surrogate_ca_forward.1} parent=1 // pred_fallthru
      _
    // Predicated region
    $region34: #{surrogate_ca_forward.1} parent=1 // pred_check
      _
    $region35: #{surrogate_ca_forward.1} parent=1 // pred_check_branch
      %53 = sbr.rel (0) target = $region37
    $region36: #{surrogate_ca_forward.1} parent=1 // pred_region
      %54 = dma.done [#allocation6], 3072
    $region37: #{surrogate_ca_forward.1} parent=1 // pred_fallthru
      _
    %v56 = vld [vmem:[%s0] sm:$0xff]
    %v57 = vld [vmem:[%s1] sm:$0xff]
    %v58 = vld [vmem:[%s2] sm:$0x1]
    %v60 = vlaneseq
    %v61 = vshrl.u32 %v60, 7
    %v62 = vsub.s32 0, %v61
    %v63 = vrot.slane %v58, %v62
    %vm65 = vcmask 64512
    %v67 = vsel %vm65, %v56, 0
    %69 = vmatprep.subr.mxu0 0.0
    %70 = vmatpush1.msra.mxu0 0.0
    %71 = vmatprep.subr.mxu0 0.0
    %72 = vmatpush1.msra.mxu0 0.0
    %73 = vmatprep.subr.mxu0 0.0
    %74 = vmatpush1.msra.mxu0 0.0
    %75 = vmatprep.subr.mxu0 0.0
    %76 = vmatpush1.msra.mxu0 0.0
    %77 = vmatprep.subr.mxu0 0.0
    %78 = vmatpush1.msra.mxu0 0.0
    %79 = vmatprep.subr.mxu0 0.0
    %80 = vmatpush1.msra.mxu0 0.0
    %81 = vmatprep.subr.mxu0 0.0
    %82 = vmatpush1.msra.mxu0 0.0
    %83 = vmatprep.subr.mxu0 0.0
    %84 = vmatpush1.msra.mxu0 0.0
    %85 = vmatprep.subr.mxu0 0.0
    %86 = vmatpush1.msra.mxu0 0.0
    %87 = vmatprep.subr.mxu0 0.0
    %88 = vmatpush1.msra.mxu0 0.0
    %89 = vmatprep.subr.mxu0 0.0
    %90 = vmatpush1.msra.mxu0 0.0
    %91 = vmatprep.subr.mxu0 0.0
    %92 = vmatpush1.msra.mxu0 0.0
    %93 = vmatprep.subr.mxu0 0.0
    %94 = vmatpush1.msra.mxu0 0.0
    %95 = vmatprep.subr.mxu0 0.0
    %96 = vmatpush1.msra.mxu0 0.0
    %97 = vmatprep.subr.mxu0 0.0
    %98 = vmatpush1.msra.mxu0 0.0
    %99 = vmatprep.subr.mxu0 0.0
    %100 = vmatpush1.msra.mxu0 %v57
    %101 = vmatprep.subr.mxu0 0.0
    %102 = vmatpush2.msra.mxu0 0.0
    %103 = vmatprep.subr.mxu0 0.0
    %104 = vmatpush2.msra.mxu0 0.0
    %105 = vmatprep.subr.mxu0 0.0
    %106 = vmatpush2.msra.mxu0 0.0
    %107 = vmatprep.subr.mxu0 0.0
    %108 = vmatpush2.msra.mxu0 0.0
    %109 = vmatprep.subr.mxu0 0.0
    %110 = vmatpush2.msra.mxu0 0.0
    %111 = vmatprep.subr.mxu0 0.0
    %112 = vmatpush2.msra.mxu0 0.0
    %113 = vmatprep.subr.mxu0 0.0
    %114 = vmatpush2.msra.mxu0 0.0
    %115 = vmatprep.subr.mxu0 0.0
    %116 = vmatpush2.msra.mxu0 0.0
    %117 = vmatprep.subr.mxu0 0.0
    %118 = vmatpush2.msra.mxu0 0.0
    %119 = vmatprep.subr.mxu0 0.0
    %120 = vmatpush2.msra.mxu0 0.0
    %121 = vmatprep.subr.mxu0 0.0
    %122 = vmatpush2.msra.mxu0 0.0
    %123 = vmatprep.subr.mxu0 0.0
    %124 = vmatpush2.msra.mxu0 0.0
    %125 = vmatprep.subr.mxu0 0.0
    %126 = vmatpush2.msra.mxu0 0.0
    %127 = vmatprep.subr.mxu0 0.0
    %128 = vmatpush2.msra.mxu0 0.0
    %129 = vmatprep.subr.mxu0 0.0
    %130 = vmatpush2.msra.mxu0 0.0
    %131 = vmatprep.subr.mxu0 0.0
    %132 = vmatpush2.msra.mxu0 0.0
    %133 = vmatprep.mubr.f32.mxu0 0.0
    %134 = vmatmul.mubr.f32.gmra.mxu0 %v67
    %v135 = vpop.f32.mrf.mxu0
    %v136 = vadd.f32 %v63, %v135
    %v137 = vpop.f32.mrf.mxu0
    %138 = vdwg.mxu0
    %v139 = vmax.f32 %v136, 0.0
    %v140 = vpack.c.bf16 %v139, %v139
    %v141 = vld [vmem:[#allocation2] sm:$0xf]
    %v142 = vld [vmem:[#allocation2 + $0x4] sm:$0xf]
    %v143 = vld [vmem:[#allocation2 + $0x8] sm:$0xf]
    %v144 = vld [vmem:[#allocation2 + $0xc] sm:$0xf]
    %v145 = vld [vmem:[#allocation2 + $0x10] sm:$0xf]
    %v146 = vld [vmem:[#allocation2 + $0x14] sm:$0xf]
    %v147 = vld [vmem:[#allocation2 + $0x18] sm:$0xf]
    %v148 = vld [vmem:[#allocation2 + $0x1c] sm:$0xf]
    %v149 = vld [vmem:[#allocation2 + $0x20] sm:$0xf]
    %v150 = vld [vmem:[#allocation2 + $0x24] sm:$0xf]
    %v151 = vld [vmem:[#allocation2 + $0x28] sm:$0xf]
    %v152 = vld [vmem:[#allocation2 + $0x2c] sm:$0xf]
    %v153 = vld [vmem:[#allocation2 + $0x30] sm:$0xf]
    %v154 = vld [vmem:[#allocation2 + $0x34] sm:$0xf]
    %v155 = vld [vmem:[#allocation2 + $0x38] sm:$0xf]
    %v156 = vld [vmem:[#allocation2 + $0x3c] sm:$0xf]
    %v157 = vld [vmem:[%s4] sm:$0x1]
    %v159 = vlaneseq
    %v160 = vshrl.u32 %v159, 7
    %v161 = vsub.s32 0, %v160
    %v162 = vrot.slane %v157, %v161
    %v180 = vunpack.c.l.b16 %v141
    %v181 = vunpack.c.l.b16 %v142
    %v182 = vunpack.c.l.b16 %v143
    %v183 = vunpack.c.l.b16 %v144
    %v184 = vunpack.c.l.b16 %v145
    %v185 = vunpack.c.l.b16 %v146
    %v186 = vunpack.c.l.b16 %v147
    %v187 = vunpack.c.l.b16 %v148
    %v188 = vunpack.c.l.b16 %v149
    %v189 = vunpack.c.l.b16 %v150
    %v190 = vunpack.c.l.b16 %v151
    %v191 = vunpack.c.l.b16 %v152
    %v192 = vunpack.c.l.b16 %v153
    %v193 = vunpack.c.l.b16 %v154
    %v194 = vunpack.c.l.b16 %v155
    %v195 = vunpack.c.l.b16 %v156
    %v196 = vpack.c.b16 %v181, %v180
    %v197 = vpack.c.b16 %v183, %v182
    %v198 = vpack.c.b16 %v185, %v184
    %v199 = vpack.c.b16 %v187, %v186
    %v200 = vpack.c.b16 %v189, %v188
    %v201 = vpack.c.b16 %v191, %v190
    %v202 = vpack.c.b16 %v193, %v192
    %v203 = vpack.c.b16 %v195, %v194
    %212 = vmatprep.subr.bf16.mxu0 0
    %213 = vmatpush1.bf16.msra.mxu0 %v203
    %214 = vmatprep.subr.bf16.mxu0 0
    %215 = vmatpush1.bf16.msra.mxu0 %v202
    %216 = vmatprep.subr.bf16.mxu0 0
    %217 = vmatpush1.bf16.msra.mxu0 %v201
    %218 = vmatprep.subr.bf16.mxu0 0
    %219 = vmatpush1.bf16.msra.mxu0 %v200
    %220 = vmatprep.subr.bf16.mxu0 0
    %221 = vmatpush1.bf16.msra.mxu0 %v199
    %222 = vmatprep.subr.bf16.mxu0 0
    %223 = vmatpush1.bf16.msra.mxu0 %v198
    %224 = vmatprep.subr.bf16.mxu0 0
    %225 = vmatpush1.bf16.msra.mxu0 %v197
    %226 = vmatprep.subr.bf16.mxu0 0
    %227 = vmatpush1.bf16.msra.mxu0 %v196
    %228 = vmatprep.subr.bf16.mxu0 0
    %229 = vmatpush2.bf16.msra.mxu0 0
    %230 = vmatprep.subr.bf16.mxu0 0
    %231 = vmatpush2.bf16.msra.mxu0 0
    %232 = vmatprep.subr.bf16.mxu0 0
    %233 = vmatpush2.bf16.msra.mxu0 0
    %234 = vmatprep.subr.bf16.mxu0 0
    %235 = vmatpush2.bf16.msra.mxu0 0
    %236 = vmatprep.subr.bf16.mxu0 0
    %237 = vmatpush2.bf16.msra.mxu0 0
    %238 = vmatprep.subr.bf16.mxu0 0
    %239 = vmatpush2.bf16.msra.mxu0 0
    %240 = vmatprep.subr.bf16.mxu0 0
    %241 = vmatpush2.bf16.msra.mxu0 0
    %242 = vmatprep.subr.bf16.mxu0 0
    %243 = vmatpush2.bf16.msra.mxu0 0
    %244 = vmatprep.mubr.bf16.mxu0 0
    %245 = vmatmul.mubr.bf16.gmra.mxu0 %v140
    %v246 = vpop.f32.mrf.mxu0
    %v247 = vadd.f32 %v162, %v246
    %v248 = vpop.f32.mrf.mxu0
    %v249 = vpop.f32.mrf.mxu0
    %v250 = vpop.f32.mrf.mxu0
    %251 = vdwg.mxu0
    %v252 = vmax.f32 %v247, 0.0
    %v253 = vpack.c.bf16 %v252, %v252
    %v254 = vld [vmem:[#allocation5] sm:$0xff]
    %v255 = vld [vmem:[#allocation5 + $0x8] sm:$0xf]
    %v256 = vld [vmem:[#allocation5 + $0xc] sm:$0xff]
    %v257 = vld [vmem:[#allocation5 + $0x14] sm:$0xf]
    %v258 = vld [vmem:[#allocation5 + $0x18] sm:$0xff]
    %v259 = vld [vmem:[#allocation5 + $0x20] sm:$0xf]
    %v260 = vld [vmem:[#allocation5 + $0x24] sm:$0xff]
    %v261 = vld [vmem:[#allocation5 + $0x2c] sm:$0xf]
    %v262 = vld [vmem:[#allocation5 + $0x30] sm:$0xff]
    %v263 = vld [vmem:[#allocation5 + $0x38] sm:$0xf]
    %v264 = vld [vmem:[#allocation5 + $0x3c] sm:$0xff]
    %v265 = vld [vmem:[#allocation5 + $0x44] sm:$0xf]
    %v266 = vld [vmem:[#allocation5 + $0x48] sm:$0xff]
    %v267 = vld [vmem:[#allocation5 + $0x50] sm:$0xf]
    %v268 = vld [vmem:[#allocation5 + $0x54] sm:$0xff]
    %v269 = vld [vmem:[#allocation5 + $0x5c] sm:$0xf]
    %v270 = vld [vmem:[#allocation5 + $0x60] sm:$0xff]
    %v271 = vld [vmem:[#allocation5 + $0x68] sm:$0xf]
    %v272 = vld [vmem:[#allocation5 + $0x6c] sm:$0xff]
    %v273 = vld [vmem:[#allocation5 + $0x74] sm:$0xf]
    %v274 = vld [vmem:[#allocation5 + $0x78] sm:$0xff]
    %v275 = vld [vmem:[#allocation5 + $0x80] sm:$0xf]
    %v276 = vld [vmem:[#allocation5 + $0x84] sm:$0xff]
    %v277 = vld [vmem:[#allocation5 + $0x8c] sm:$0xf]
    %v278 = vld [vmem:[#allocation5 + $0x90] sm:$0xff]
    %v279 = vld [vmem:[#allocation5 + $0x98] sm:$0xf]
    %v280 = vld [vmem:[#allocation5 + $0x9c] sm:$0xff]
    %v281 = vld [vmem:[#allocation5 + $0xa4] sm:$0xf]
    %v282 = vld [vmem:[#allocation5 + $0xa8] sm:$0xff]
    %v283 = vld [vmem:[#allocation5 + $0xb0] sm:$0xf]
    %v284 = vld [vmem:[#allocation5 + $0xb4] sm:$0xff]
    %v285 = vld [vmem:[#allocation5 + $0xbc] sm:$0xf]
    %v286 = vld [vmem:[%s6] sm:$0x7]
    %v288 = vlaneseq
    %v289 = vshrl.u32 %v288, 7
    %v290 = vsub.s32 0, %v289
    %v291 = vrot.slane %v286, %v290
    %v292 = vlaneseq
    %v293 = vshrl.u32 %v292, 7
    %v294 = vsub.s32 1, %v293
    %v295 = vrot.slane %v286, %v294
    %v296 = vlaneseq
    %v297 = vshrl.u32 %v296, 7
    %v298 = vsub.s32 2, %v297
    %v299 = vrot.slane %v286, %v298
    %v335 = vunpack.c.l.b16 %v254
    %v336 = vunpack.c.h.b16 %v254
    %v337 = vunpack.c.l.b16 %v255
    %v338 = vunpack.c.l.b16 %v256
    %v339 = vunpack.c.h.b16 %v256
    %v340 = vunpack.c.l.b16 %v257
    %v341 = vunpack.c.l.b16 %v258
    %v342 = vunpack.c.h.b16 %v258
    %v343 = vunpack.c.l.b16 %v259
    %v344 = vunpack.c.l.b16 %v260
    %v345 = vunpack.c.h.b16 %v260
    %v346 = vunpack.c.l.b16 %v261
    %v347 = vunpack.c.l.b16 %v262
    %v348 = vunpack.c.h.b16 %v262
    %v349 = vunpack.c.l.b16 %v263
    %v350 = vunpack.c.l.b16 %v264
    %v351 = vunpack.c.h.b16 %v264
    %v352 = vunpack.c.l.b16 %v265
    %v353 = vunpack.c.l.b16 %v266
    %v354 = vunpack.c.h.b16 %v266
    %v355 = vunpack.c.l.b16 %v267
    %v356 = vunpack.c.l.b16 %v268
    %v357 = vunpack.c.h.b16 %v268
    %v358 = vunpack.c.l.b16 %v269
    %v359 = vunpack.c.l.b16 %v270
    %v360 = vunpack.c.h.b16 %v270
    %v361 = vunpack.c.l.b16 %v271
    %v362 = vunpack.c.l.b16 %v272
    %v363 = vunpack.c.h.b16 %v272
    %v364 = vunpack.c.l.b16 %v273
    %v365 = vunpack.c.l.b16 %v274
    %v366 = vunpack.c.h.b16 %v274
    %v367 = vunpack.c.l.b16 %v275
    %v368 = vunpack.c.l.b16 %v276
    %v369 = vunpack.c.h.b16 %v276
    %v370 = vunpack.c.l.b16 %v277
    %v371 = vunpack.c.l.b16 %v278
    %v372 = vunpack.c.h.b16 %v278
    %v373 = vunpack.c.l.b16 %v279
    %v374 = vunpack.c.l.b16 %v280
    %v375 = vunpack.c.h.b16 %v280
    %v376 = vunpack.c.l.b16 %v281
    %v377 = vunpack.c.l.b16 %v282
    %v378 = vunpack.c.h.b16 %v282
    %v379 = vunpack.c.l.b16 %v283
    %v380 = vunpack.c.l.b16 %v284
    %v381 = vunpack.c.h.b16 %v284
    %v382 = vunpack.c.l.b16 %v285
    %v383 = vpack.c.b16 %v338, %v335
    %v384 = vpack.c.b16 %v339, %v336
    %v385 = vpack.c.b16 %v340, %v337
    %v386 = vpack.c.b16 %v344, %v341
    %v387 = vpack.c.b16 %v345, %v342
    %v388 = vpack.c.b16 %v346, %v343
    %v389 = vpack.c.b16 %v350, %v347
    %v390 = vpack.c.b16 %v351, %v348
    %v391 = vpack.c.b16 %v352, %v349
    %v392 = vpack.c.b16 %v356, %v353
    %v393 = vpack.c.b16 %v357, %v354
    %v394 = vpack.c.b16 %v358, %v355
    %v395 = vpack.c.b16 %v362, %v359
    %v396 = vpack.c.b16 %v363, %v360
    %v397 = vpack.c.b16 %v364, %v361
    %v398 = vpack.c.b16 %v368, %v365
    %v399 = vpack.c.b16 %v369, %v366
    %v400 = vpack.c.b16 %v370, %v367
    %v401 = vpack.c.b16 %v374, %v371
    %v402 = vpack.c.b16 %v375, %v372
    %v403 = vpack.c.b16 %v376, %v373
    %v404 = vpack.c.b16 %v380, %v377
    %v405 = vpack.c.b16 %v381, %v378
    %v406 = vpack.c.b16 %v382, %v379
    %431 = vmatprep.subr.bf16.mxu0 %v405
    %432 = vmatpush1.bf16.msra.mxu0 %v404
    %433 = vmatprep.subr.bf16.mxu0 %v402
    %434 = vmatpush1.bf16.msra.mxu0 %v401
    %435 = vmatprep.subr.bf16.mxu0 %v399
    %436 = vmatpush1.bf16.msra.mxu0 %v398
    %437 = vmatprep.subr.bf16.mxu0 %v396
    %438 = vmatpush1.bf16.msra.mxu0 %v395
    %439 = vmatprep.subr.bf16.mxu0 %v393
    %440 = vmatpush1.bf16.msra.mxu0 %v392
    %441 = vmatprep.subr.bf16.mxu0 %v390
    %442 = vmatpush1.bf16.msra.mxu0 %v389
    %443 = vmatprep.subr.bf16.mxu0 %v387
    %444 = vmatpush1.bf16.msra.mxu0 %v386
    %445 = vmatprep.subr.bf16.mxu0 %v384
    %446 = vmatpush1.bf16.msra.mxu0 %v383
    %447 = vmatprep.subr.bf16.mxu0 0
    %448 = vmatpush2.bf16.msra.mxu0 0
    %449 = vmatprep.subr.bf16.mxu0 0
    %450 = vmatpush2.bf16.msra.mxu0 0
    %451 = vmatprep.subr.bf16.mxu0 0
    %452 = vmatpush2.bf16.msra.mxu0 0
    %453 = vmatprep.subr.bf16.mxu0 0
    %454 = vmatpush2.bf16.msra.mxu0 0
    %455 = vmatprep.subr.bf16.mxu0 0
    %456 = vmatpush2.bf16.msra.mxu0 0
    %457 = vmatprep.subr.bf16.mxu0 0
    %458 = vmatpush2.bf16.msra.mxu0 0
    %459 = vmatprep.subr.bf16.mxu0 0
    %460 = vmatpush2.bf16.msra.mxu0 0
    %461 = vmatprep.subr.bf16.mxu0 0
    %462 = vmatpush2.bf16.msra.mxu0 0
    %463 = vmatprep.mubr.bf16.mxu0 0
    %464 = vmatmul.mubr.bf16.gmra.mxu0 %v253
    %v465 = vpop.f32.mrf.mxu0
    %v466 = vadd.f32 %v291, %v465
    %v467 = vpop.f32.mrf.mxu0
    %v468 = vadd.f32 %v295, %v467
    %v469 = vpop.f32.mrf.mxu0
    %v470 = vpop.f32.mrf.mxu0
    %471 = vdwg.mxu0
    %472 = vmatprep.subr.bf16.mxu0 0
    %473 = vmatpush1.bf16.msra.mxu0 %v406
    %474 = vmatprep.subr.bf16.mxu0 0
    %475 = vmatpush1.bf16.msra.mxu0 %v403
    %476 = vmatprep.subr.bf16.mxu0 0
    %477 = vmatpush1.bf16.msra.mxu0 %v400
    %478 = vmatprep.subr.bf16.mxu0 0
    %479 = vmatpush1.bf16.msra.mxu0 %v397
    %480 = vmatprep.subr.bf16.mxu0 0
    %481 = vmatpush1.bf16.msra.mxu0 %v394
    %482 = vmatprep.subr.bf16.mxu0 0
    %483 = vmatpush1.bf16.msra.mxu0 %v391
    %484 = vmatprep.subr.bf16.mxu0 0
    %485 = vmatpush1.bf16.msra.mxu0 %v388
    %486 = vmatprep.subr.bf16.mxu0 0
    %487 = vmatpush1.bf16.msra.mxu0 %v385
    %488 = vmatprep.subr.bf16.mxu0 0
    %489 = vmatpush2.bf16.msra.mxu0 0
    %490 = vmatprep.subr.bf16.mxu0 0
    %491 = vmatpush2.bf16.msra.mxu0 0
    %492 = vmatprep.subr.bf16.mxu0 0
    %493 = vmatpush2.bf16.msra.mxu0 0
    %494 = vmatprep.subr.bf16.mxu0 0
    %495 = vmatpush2.bf16.msra.mxu0 0
    %496 = vmatprep.subr.bf16.mxu0 0
    %497 = vmatpush2.bf16.msra.mxu0 0
    %498 = vmatprep.subr.bf16.mxu0 0
    %499 = vmatpush2.bf16.msra.mxu0 0
    %500 = vmatprep.subr.bf16.mxu0 0
    %501 = vmatpush2.bf16.msra.mxu0 0
    %502 = vmatprep.subr.bf16.mxu0 0
    %503 = vmatpush2.bf16.msra.mxu0 0
    %504 = vmatprep.mubr.bf16.mxu0 0
    %505 = vmatmul.mubr.bf16.gmra.mxu0 %v253
    %v506 = vpop.f32.mrf.mxu0
    %v507 = vadd.f32 %v299, %v506
    %v508 = vpop.f32.mrf.mxu0
    %v509 = vpop.f32.mrf.mxu0
    %v510 = vpop.f32.mrf.mxu0
    %511 = vdwg.mxu0
    %512 = vst [vmem:[#allocation7] sm:$0xff] %v466
    %513 = vst [vmem:[#allocation7 + $0x8] sm:$0xff] %v468
    %vm514 = vcmask 195584
    %515 = vst.msk [vmem:[#allocation7 + $0x10] sm:$0xff] %vm514, %v507
    // Predicated region
    $region38: #{surrogate_ca_forward.1} parent=1 // pred_check
      _
    $region39: #{surrogate_ca_forward.1} parent=1 // pred_check_branch
      %517 = sbr.rel (0) target = $region41
    $region40: #{surrogate_ca_forward.1} parent=1 // pred_region
      %s519 = ssub.s32 384, 384
      %520 = vsyncadd [#allocation4], %s519
      %s522 = sshll.u32 [#allocation7], 4
      %s523 = int_to_ptr.vmem [resolvable:$true] %s522
      %525 = dma.vmem_to_hbm [thread:$0]  %s523, 384, %s7, [#allocation4]
    $region41: #{surrogate_ca_forward.1} parent=1 // pred_fallthru
      _
    // Predicated region
    $region42: #{surrogate_ca_forward.1} parent=1 // pred_check
      _
    $region43: #{surrogate_ca_forward.1} parent=1 // pred_check_branch
      %527 = sbr.rel (0) target = $region45
    $region44: #{surrogate_ca_forward.1} parent=1 // pred_region
      %528 = dma.done [#allocation4], 384
    $region45: #{surrogate_ca_forward.1} parent=1 // pred_fallthru
      _
    %529 = vsyncpa [#allocation3], 1
    %530 = vsyncpa [#allocation6], 1
    %531 = vsyncpa [#allocation4], 1

</llo_original>
